<compile_context>
chip_gen: v5e
topology: v5e:2x2
jax: 0.10.0
libtpu: 0.0.40
codegen_flags: <defaults>
</compile_context>

<pallas_src>
from functools import partial

import jax
import jax.numpy as jnp
from jax.experimental import pallas as pl
from jax.experimental.pallas import tpu as pltpu


# -----------------------------------------------------------------------------
# Point dict glue (plain JAX, mirrors batch2offset / offset2batch semantics)
# -----------------------------------------------------------------------------
def batch2offset(batch, num_batches):
    counts = jnp.bincount(batch, length=num_batches)
    return jnp.cumsum(counts)


def offset2bincount(offset):
    return jnp.diff(offset, prepend=jnp.zeros((1,), dtype=offset.dtype))


def offset2batch(offset, num_points=None):
    # TODO(synk): int(offset[-1]) breaks under jit tracing; pass num_points then.
    bincount = offset2bincount(offset)
    total = int(offset[-1]) if num_points is None else num_points
    return jnp.repeat(jnp.arange(len(bincount), dtype=jnp.int32), bincount,
                      total_repeat_length=total)


def make_point(feat=None, batch=None, offset=None, num_batches=None,
               num_points=None):
    point = {}
    if feat is not None:
        point["feat"] = feat
    if batch is not None:
        point["batch"] = batch
        point["offset"] = batch2offset(batch, num_batches)
    elif offset is not None:
        point["offset"] = offset
        point["batch"] = offset2batch(offset, num_points)
    return point


# -----------------------------------------------------------------------------
# Helpers
# -----------------------------------------------------------------------------
def _round_up(x, m):
    return (x + m - 1) // m * m


def _cdiv(a, b):
    return -(-a // b)


def _vmem_budget_bytes():
    """Generation-aware scoped-VMEM budget: physical capacity minus ~8 MiB
    headroom for Mosaic internal scratch, capped at ~100 MiB on 128-MiB parts
    (v5e/v6e) and ~56 MiB on 64-MiB parts (v7x)."""
    cap = 64 << 20  # conservative default = v7x per-TensorCore VMEM
    try:
        cap = int(pltpu.get_tpu_info().vmem_capacity_bytes)
    except Exception:
        pass
    return max(min(cap - (8 << 20), 100 << 20), 16 << 20)


def _num_tensorcores():
    """Best-effort TensorCore count; 1 (no grid splitting) if unknown."""
    try:
        info = pltpu.get_tpu_info()
    except Exception:
        return 1
    for name in ("num_cores", "core_count", "num_tensorcores",
                 "tensorcores_per_chip"):
        v = getattr(info, name, None)
        if isinstance(v, int) and v > 0:
            return v
    return 1


def _choose_tile_m(n, requested, num_cores):
    """Row tile: multiples of 256 (full MXU passes / bf16 sublane packing) for
    large N, 16-granular for small N.  Only split the grid for multi-TC parts."""
    if n <= 256:
        return max(16, _round_up(n, 16))
    tm = min(_round_up(int(requested), 256), _round_up(n, 256))
    if num_cores > 1:
        per_core = max(256, _round_up(_cdiv(n, num_cores), 256))
        tm = min(tm, per_core)
    return tm


def _vmem_need_bytes(tm, c_in, h_pad, c_out, feat_b, io_b, out_b):
    """Conservative per-call VMEM estimate: double-buffered feat/out tiles,
    (possibly double-buffered) resident weights, f32 hidden intermediate,
    bf16 hidden copy, f32 output accumulator."""
    tiles = 2 * tm * c_in * feat_b + 2 * tm * c_out * out_b
    weights = 2 * ((c_in * h_pad + h_pad * c_out) * io_b + (h_pad + c_out) * 4)
    inter = tm * h_pad * (4 + io_b) + tm * c_out * 4
    return tiles + weights + inter


# -----------------------------------------------------------------------------
# Pallas kernel: fused Linear -> ReLU -> Linear applied to point["feat"]
# -----------------------------------------------------------------------------
def _seq_mlp_kernel(x_ref, w1_ref, b1_ref, w2_ref, b2_ref, o_ref):
    # x: (TM, C_in) native feat dtype; W bf16; b f32; out (TM, C_out) bf16.
    x = x_ref[...].astype(w1_ref.dtype)          # VPU cast (free slot; mem-bound)
    h = jnp.dot(x, w1_ref[...], preferred_element_type=jnp.float32) + b1_ref[...]
    h = jnp.maximum(h, 0.0)                      # ReLU (VPU)
    h = h.astype(w2_ref.dtype)                   # bf16 into the second MXU pass
    y = jnp.dot(h, w2_ref[...], preferred_element_type=jnp.float32) + b2_ref[...]
    o_ref[...] = y.astype(o_ref.dtype)


def prepare_mlp_params(w1, b1, w2, b2, *, io_dtype=jnp.bfloat16):
    """Pad/cast weights ONCE (outside the per-call path).
    Hidden dim is zero-padded to a multiple of 128 (lane-dense intermediate);
    output channels are left unpadded (they map to the HBM write stream)."""
    c_in, h = w1.shape
    h_pad = _round_up(h, 128)
    w1_p = jnp.pad(w1, ((0, 0), (0, h_pad - h))).astype(io_dtype)
    b1_p = jnp.pad(jnp.reshape(b1, (1, -1)), ((0, 0), (0, h_pad - h))
                   ).astype(jnp.float32)
    w2_p = jnp.pad(w2, ((0, h_pad - h), (0, 0))).astype(io_dtype)
    b2_p = jnp.reshape(b2, (1, -1)).astype(jnp.float32)
    return (w1_p, b1_p, w2_p, b2_p)


def seq_mlp_pallas(feat, params, *, tile_m=None, out_dtype=jnp.bfloat16):
    """Fused Linear->ReLU->Linear on point features: [N, C_in] -> [N, C_out]."""
    w1_p, b1_p, w2_p, b2_p = params
    N, C_in = feat.shape
    assert w1_p.shape[0] == C_in, "feat / weight channel mismatch"
    H_pad = w1_p.shape[1]
    C_out = w2_p.shape[1]
    out_dtype = jnp.dtype(out_dtype)

    feat_b = jnp.dtype(feat.dtype).itemsize
    io_b = jnp.dtype(w1_p.dtype).itemsize
    out_b = out_dtype.itemsize

    budget = _vmem_budget_bytes()
    if tile_m is None:
        # bigger tiles on 128-MiB VMEM parts (v5e/v6e), moderate on v7x (64 MiB)
        tile_m = 4096 if budget >= (96 << 20) else 2048
    tm = _choose_tile_m(N, tile_m, _num_tensorcores())
    # Auto-shrink tile until the (inclusive) VMEM estimate fits the budget.
    while tm > 256 and _vmem_need_bytes(tm, C_in, H_pad, C_out,
                                        feat_b, io_b, out_b) > budget:
        tm = max(256, _round_up(tm // 2, 256))

    N_pad = _round_up(N, tm)
    # NOTE: no wrapper-level astype on feat — the kernel reads the native dtype
    # once and casts on the VPU, instead of an extra un-fused HBM pass.
    feat_p = feat if N_pad == N else jnp.pad(feat, ((0, N_pad - N), (0, 0)))

    need = _vmem_need_bytes(tm, C_in, H_pad, C_out, feat_b, io_b, out_b)
    vmem_limit = int(min(max(need + need // 4 + (8 << 20), 32 << 20), budget))

    weight_bytes = (C_in * H_pad + H_pad * C_out) * io_b + (H_pad + C_out) * 4
    flops = 2 * N_pad * (C_in * H_pad + H_pad * C_out)
    bytes_accessed = int(N_pad * C_in * feat_b + N_pad * C_out * out_b
                         + weight_bytes)
    grid = (N_pad // tm,)

    def call_kernel(single_buffer_consts):
        def const_spec(shape):
            # Resident weights/biases never re-fetch: 1 buffer saves VMEM
            # (matters most on v7x's 64 MiB per-TC VMEM).
            if single_buffer_consts:
                return pl.BlockSpec(shape, lambda i: (0, 0),
                                    pipeline_mode=pl.Buffered(1))
            return pl.BlockSpec(shape, lambda i: (0, 0))

        return pl.pallas_call(
            _seq_mlp_kernel,
            out_shape=jax.ShapeDtypeStruct((N_pad, C_out), out_dtype),
            grid_spec=pltpu.PrefetchScalarGridSpec(
                num_scalar_prefetch=0,
                grid=grid,
                in_specs=[
                    pl.BlockSpec((tm, C_in), lambda i: (i, 0)),   # feat tile
                    const_spec((C_in, H_pad)),                    # W1 (resident)
                    const_spec((1, H_pad)),                       # b1
                    const_spec((H_pad, C_out)),                   # W2 (resident)
                    const_spec((1, C_out)),                       # b2
                ],
                out_specs=pl.BlockSpec((tm, C_out), lambda i: (i, 0)),
            ),
            compiler_params=pltpu.CompilerParams(
                dimension_semantics=("parallel",),
                vmem_limit_bytes=vmem_limit,
            ),
            cost_estimate=pl.CostEstimate(
                flops=flops, transcendentals=0, bytes_accessed=bytes_accessed),
        )(feat_p, w1_p, b1_p, w2_p, b2_p)

    try:
        # block here so an unsupported pipeline_mode surfaces inside the try
        # (eager path; under jit this simply traces once).
        out = jax.block_until_ready(call_kernel(True))
    except Exception:
        # pl.Buffered(1) not supported on this jax build -> default buffering.
        out = call_kernel(False)

    # Output channels are NOT lane-padded, so only row padding (if any) must be
    # stripped; padded rows hold relu(b1)@W2 + b2 garbage.
    if N_pad != N:
        out = out[:N]
    return out


# -----------------------------------------------------------------------------
# PointSequential: container semantics (modules applied to Point / feat)
# -----------------------------------------------------------------------------
class PointSequentialJAX:
    """Sequential container mirroring PointSequential.forward:
       - 'point' modules consume/return the Point dict,
       - plain modules are applied to point['feat'] (dense path)."""

    def __init__(self, *modules):
        # each entry: (kind, fn) with kind in {"point", "feat"}
        self._modules = list(modules)

    def add(self, kind, fn):
        self._modules.append((kind, fn))

    def __len__(self):
        return len(self._modules)

    def __call__(self, point):
        for kind, fn in self._modules:
            if kind == "point":
                point = fn(point)
            else:  # applied to feat, like nn.Module on Point.feat
                if isinstance(point, dict):
                    point = dict(point)
                    point["feat"] = fn(point["feat"])
                else:
                    point = fn(point)
        return point


# -----------------------------------------------------------------------------
# Parameter init (deterministic, PyTorch-Linear-like scale) + reference
# -----------------------------------------------------------------------------
def init_params(key, c_in, hidden, c_out, dtype=jnp.float32):
    k1, k2, k3, k4 = jax.random.split(key, 4)
    lim1 = 1.0 / jnp.sqrt(c_in)
    lim2 = 1.0 / jnp.sqrt(hidden)
    w1 = jax.random.uniform(k1, (c_in, hidden), dtype, -lim1, lim1)
    b1 = jax.random.uniform(k2, (1, hidden), dtype, -lim1, lim1)
    w2 = jax.random.uniform(k3, (hidden, c_out), dtype, -lim2, lim2)
    b2 = jax.random.uniform(k4, (1, c_out), dtype, -lim2, lim2)
    return w1, b1, w2, b2


def reference_mlp(feat, w1, b1, w2, b2):
    # Mirrors the kernel's bf16-operand / f32-accumulate numerics.
    x = feat.astype(jnp.bfloat16).astype(jnp.float32)
    w1c = w1.astype(jnp.bfloat16).astype(jnp.float32)
    w2c = w2.astype(jnp.bfloat16).astype(jnp.float32)
    h = jnp.maximum(x @ w1c + jnp.reshape(b1, (1, -1)).astype(jnp.float32), 0.0)
    h = h.astype(jnp.bfloat16).astype(jnp.float32)
    return h @ w2c + jnp.reshape(b2, (1, -1)).astype(jnp.float32)


if __name__ == "__main__":
    key = jax.random.PRNGKey(0)
    k_feat, k_param = jax.random.split(key)

    # Small shapes: 128 points, 2 batches, 32 input channels, 64 hidden, 32 out.
    N, C_IN, HIDDEN, C_OUT = 128, 32, 64, 32
    NUM_BATCHES = 2

    feat = jax.random.normal(k_feat, (N, C_IN), dtype=jnp.float32)
    batch = jnp.concatenate([
        jnp.zeros((56,), dtype=jnp.int32),
        jnp.ones((N - 56,), dtype=jnp.int32),
    ])
    point = make_point(feat=feat, batch=batch, num_batches=NUM_BATCHES)

    w1, b1, w2, b2 = init_params(k_param, C_IN, HIDDEN, C_OUT)
    params = prepare_mlp_params(w1, b1, w2, b2)   # pad/cast once, off hot path

    # PointSequential with one fused feat-module (the Pallas kernel).
    seq = PointSequentialJAX(
        ("feat", partial(seq_mlp_pallas, params=params)),
    )

    out_point = seq(point)
    out = jax.block_until_ready(out_point["feat"])

    # Correctness check against pure-JAX reference (same bf16-operand numerics).
    ref = reference_mlp(feat, w1, b1, w2, b2)
    assert out.shape == (N, C_OUT)
    assert out.dtype == jnp.bfloat16              # bf16 output stream
    assert jnp.allclose(out.astype(jnp.float32), ref, atol=3e-2, rtol=3e-2), \
        "mismatch vs reference"
    # offset/batch bookkeeping sanity (PointSequential leaves them untouched).
    assert int(out_point["offset"][-1]) == N

    print("KERNEL_OK")
</pallas_src>

<mosaic_0001>
module attributes {stable_mosaic.version = 11 : i64} {
  func.func @_seq_mlp_kernel(%arg0: i32, %arg1: memref<128x32xf32, #tpu.memory_space<vmem>>, %arg2: memref<32x128xbf16, #tpu.memory_space<vmem>>, %arg3: memref<1x128xf32, #tpu.memory_space<vmem>>, %arg4: memref<128x32xbf16, #tpu.memory_space<vmem>>, %arg5: memref<1x32xf32, #tpu.memory_space<vmem>>, %arg6: memref<128x32xbf16, #tpu.memory_space<vmem>>) attributes {dimension_semantics = [#tpu.dimension_semantics<parallel>], iteration_bounds = array<i64: 1>, scalar_prefetch = 0 : i64, scratch_operands = 0 : i64, tpu.core_type = #tpu.core_type<tc>, window_params = [{transform_indices = @transform_0, window_bounds = array<i64: 128, 32>}, {pipeline_mode = #tpu.pipeline_mode<synchronous>, transform_indices = @transform_1, window_bounds = array<i64: 32, 128>}, {pipeline_mode = #tpu.pipeline_mode<synchronous>, transform_indices = @transform_2, window_bounds = array<i64: 1, 128>}, {pipeline_mode = #tpu.pipeline_mode<synchronous>, transform_indices = @transform_3, window_bounds = array<i64: 128, 32>}, {pipeline_mode = #tpu.pipeline_mode<synchronous>, transform_indices = @transform_4, window_bounds = array<i64: 1, 32>}, {transform_indices = @transform_5, window_bounds = array<i64: 128, 32>}]} {
    %c0 = arith.constant 0 : index
    %c0_0 = arith.constant 0 : index
    %0 = vector.load %arg1[%c0, %c0_0] : memref<128x32xf32, #tpu.memory_space<vmem>>, vector<128x32xf32>
    %1 = arith.truncf %0 : vector<128x32xf32> to vector<128x32xbf16>
    %c0_1 = arith.constant 0 : index
    %c0_2 = arith.constant 0 : index
    %2 = vector.load %arg2[%c0_1, %c0_2] : memref<32x128xbf16, #tpu.memory_space<vmem>>, vector<32x128xbf16>
    %cst = arith.constant dense<0.000000e+00> : vector<128x128xf32>
    %3 = tpu.matmul %1, %2, %cst {dimension_numbers = #tpu.dot_dimension_numbers<[1], [0], [0], [1], [0, 0, 1, 1], [], []>} : vector<128x32xbf16>, vector<32x128xbf16>, vector<128x128xf32> -> vector<128x128xf32>
    %c0_3 = arith.constant 0 : index
    %c0_4 = arith.constant 0 : index
    %4 = vector.load %arg3[%c0_3, %c0_4] : memref<1x128xf32, #tpu.memory_space<vmem>>, vector<1x128xf32>
    %5 = vector.broadcast %4 : vector<1x128xf32> to vector<128x128xf32>
    %6 = arith.addf %3, %5 : vector<128x128xf32>
    %cst_5 = arith.constant 0.000000e+00 : f32
    %7 = vector.broadcast %cst_5 : f32 to vector<128x128xf32>
    %8 = arith.maximumf %6, %7 : vector<128x128xf32>
    %9 = arith.truncf %8 : vector<128x128xf32> to vector<128x128xbf16>
    %c0_6 = arith.constant 0 : index
    %c0_7 = arith.constant 0 : index
    %10 = vector.load %arg4[%c0_6, %c0_7] : memref<128x32xbf16, #tpu.memory_space<vmem>>, vector<128x32xbf16>
    %cst_8 = arith.constant dense<0.000000e+00> : vector<128x32xf32>
    %11 = tpu.matmul %9, %10, %cst_8 {dimension_numbers = #tpu.dot_dimension_numbers<[1], [0], [0], [1], [0, 0, 1, 1], [], []>} : vector<128x128xbf16>, vector<128x32xbf16>, vector<128x32xf32> -> vector<128x32xf32>
    %c0_9 = arith.constant 0 : index
    %c0_10 = arith.constant 0 : index
    %12 = vector.load %arg5[%c0_9, %c0_10] : memref<1x32xf32, #tpu.memory_space<vmem>>, vector<1x32xf32>
    %13 = vector.broadcast %12 : vector<1x32xf32> to vector<128x32xf32>
    %14 = arith.addf %11, %13 : vector<128x32xf32>
    %15 = arith.truncf %14 : vector<128x32xf32> to vector<128x32xbf16>
    %c0_11 = arith.constant 0 : index
    %c0_12 = arith.constant 0 : index
    %16 = vector.load %arg6[%c0_11, %c0_12] : memref<128x32xbf16, #tpu.memory_space<vmem>>, vector<128x32xbf16>
    tpu.vector_store %arg6[%c0_11, %c0_12], %15 {strides = array<i32>} : memref<128x32xbf16, #tpu.memory_space<vmem>>, vector<128x32xbf16>,
    return
  }
  func.func @transform_0(%arg0: i32) -> (i32, i32) {
    %c0_i32 = arith.constant 0 : i32
    %c0_i32_0 = arith.constant 0 : i32
    return %arg0, %c0_i32 : i32, i32
  }
  func.func @transform_1(%arg0: i32) -> (i32, i32) {
    %c0_i32 = arith.constant 0 : i32
    %c0_i32_0 = arith.constant 0 : i32
    %c0_i32_1 = arith.constant 0 : i32
    return %c0_i32, %c0_i32_0 : i32, i32
  }
  func.func @transform_2(%arg0: i32) -> (i32, i32) {
    %c0_i32 = arith.constant 0 : i32
    %c0_i32_0 = arith.constant 0 : i32
    %c0_i32_1 = arith.constant 0 : i32
    return %c0_i32, %c0_i32_0 : i32, i32
  }
  func.func @transform_3(%arg0: i32) -> (i32, i32) {
    %c0_i32 = arith.constant 0 : i32
    %c0_i32_0 = arith.constant 0 : i32
    %c0_i32_1 = arith.constant 0 : i32
    return %c0_i32, %c0_i32_0 : i32, i32
  }
  func.func @transform_4(%arg0: i32) -> (i32, i32) {
    %c0_i32 = arith.constant 0 : i32
    %c0_i32_0 = arith.constant 0 : i32
    %c0_i32_1 = arith.constant 0 : i32
    return %c0_i32, %c0_i32_0 : i32, i32
  }
  func.func @transform_5(%arg0: i32) -> (i32, i32) {
    %c0_i32 = arith.constant 0 : i32
    %c0_i32_0 = arith.constant 0 : i32
    return %arg0, %c0_i32 : i32, i32
  }
}

module attributes {stable_mosaic.version = 11 : i64} {
  func.func @_seq_mlp_kernel(%arg0: i32, %arg1: memref<128x32xf32, #tpu.memory_space<vmem>>, %arg2: memref<32x128xbf16, #tpu.memory_space<vmem>>, %arg3: memref<1x128xf32, #tpu.memory_space<vmem>>, %arg4: memref<128x32xbf16, #tpu.memory_space<vmem>>, %arg5: memref<1x32xf32, #tpu.memory_space<vmem>>, %arg6: memref<128x32xbf16, #tpu.memory_space<vmem>>) attributes {dimension_semantics = [#tpu.dimension_semantics<parallel>], iteration_bounds = array<i64: 1>, scalar_prefetch = 0 : i64, scratch_operands = 0 : i64, tpu.core_type = #tpu.core_type<tc>, window_params = [{transform_indices = @transform_0, window_bounds = array<i64: 128, 32>}, {pipeline_mode = #tpu.pipeline_mode<synchronous>, transform_indices = @transform_1, window_bounds = array<i64: 32, 128>}, {pipeline_mode = #tpu.pipeline_mode<synchronous>, transform_indices = @transform_2, window_bounds = array<i64: 1, 128>}, {pipeline_mode = #tpu.pipeline_mode<synchronous>, transform_indices = @transform_3, window_bounds = array<i64: 128, 32>}, {pipeline_mode = #tpu.pipeline_mode<synchronous>, transform_indices = @transform_4, window_bounds = array<i64: 1, 32>}, {transform_indices = @transform_5, window_bounds = array<i64: 128, 32>}]} {
    %c0 = arith.constant 0 : index
    %c0_0 = arith.constant 0 : index
    %0 = vector.load %arg1[%c0, %c0_0] : memref<128x32xf32, #tpu.memory_space<vmem>>, vector<128x32xf32>
    %1 = arith.truncf %0 : vector<128x32xf32> to vector<128x32xbf16>
    %c0_1 = arith.constant 0 : index
    %c0_2 = arith.constant 0 : index
    %2 = vector.load %arg2[%c0_1, %c0_2] : memref<32x128xbf16, #tpu.memory_space<vmem>>, vector<32x128xbf16>
    %cst = arith.constant dense<0.000000e+00> : vector<128x128xf32>
    %3 = tpu.matmul %1, %2, %cst {dimension_numbers = #tpu.dot_dimension_numbers<[1], [0], [0], [1], [0, 0, 1, 1], [], []>} : vector<128x32xbf16>, vector<32x128xbf16>, vector<128x128xf32> -> vector<128x128xf32>
    %c0_3 = arith.constant 0 : index
    %c0_4 = arith.constant 0 : index
    %4 = vector.load %arg3[%c0_3, %c0_4] : memref<1x128xf32, #tpu.memory_space<vmem>>, vector<1x128xf32>
    %5 = vector.broadcast %4 : vector<1x128xf32> to vector<128x128xf32>
    %6 = arith.addf %3, %5 : vector<128x128xf32>
    %cst_5 = arith.constant 0.000000e+00 : f32
    %7 = vector.broadcast %cst_5 : f32 to vector<128x128xf32>
    %8 = arith.maximumf %6, %7 : vector<128x128xf32>
    %9 = arith.truncf %8 : vector<128x128xf32> to vector<128x128xbf16>
    %c0_6 = arith.constant 0 : index
    %c0_7 = arith.constant 0 : index
    %10 = vector.load %arg4[%c0_6, %c0_7] : memref<128x32xbf16, #tpu.memory_space<vmem>>, vector<128x32xbf16>
    %cst_8 = arith.constant dense<0.000000e+00> : vector<128x32xf32>
    %11 = tpu.matmul %9, %10, %cst_8 {dimension_numbers = #tpu.dot_dimension_numbers<[1], [0], [0], [1], [0, 0, 1, 1], [], []>} : vector<128x128xbf16>, vector<128x32xbf16>, vector<128x32xf32> -> vector<128x32xf32>
    %c0_9 = arith.constant 0 : index
    %c0_10 = arith.constant 0 : index
    %12 = vector.load %arg5[%c0_9, %c0_10] : memref<1x32xf32, #tpu.memory_space<vmem>>, vector<1x32xf32>
    %13 = vector.broadcast %12 : vector<1x32xf32> to vector<128x32xf32>
    %14 = arith.addf %11, %13 : vector<128x32xf32>
    %15 = arith.truncf %14 : vector<128x32xf32> to vector<128x32xbf16>
    %c0_11 = arith.constant 0 : index
    %c0_12 = arith.constant 0 : index
    %16 = vector.load %arg6[%c0_11, %c0_12] : memref<128x32xbf16, #tpu.memory_space<vmem>>, vector<128x32xbf16>
    tpu.vector_store %arg6[%c0_11, %c0_12], %15 {strides = array<i32>} : memref<128x32xbf16, #tpu.memory_space<vmem>>, vector<128x32xbf16>,
    return
  }
  func.func @transform_0(%arg0: i32) -> (i32, i32) {
    %c0_i32 = arith.constant 0 : i32
    %c0_i32_0 = arith.constant 0 : i32
    return %arg0, %c0_i32 : i32, i32
  }
  func.func @transform_1(%arg0: i32) -> (i32, i32) {
    %c0_i32 = arith.constant 0 : i32
    %c0_i32_0 = arith.constant 0 : i32
    %c0_i32_1 = arith.constant 0 : i32
    return %c0_i32, %c0_i32_0 : i32, i32
  }
  func.func @transform_2(%arg0: i32) -> (i32, i32) {
    %c0_i32 = arith.constant 0 : i32
    %c0_i32_0 = arith.constant 0 : i32
    %c0_i32_1 = arith.constant 0 : i32
    return %c0_i32, %c0_i32_0 : i32, i32
  }
  func.func @transform_3(%arg0: i32) -> (i32, i32) {
    %c0_i32 = arith.constant 0 : i32
    %c0_i32_0 = arith.constant 0 : i32
    %c0_i32_1 = arith.constant 0 : i32
    return %c0_i32, %c0_i32_0 : i32, i32
  }
  func.func @transform_4(%arg0: i32) -> (i32, i32) {
    %c0_i32 = arith.constant 0 : i32
    %c0_i32_0 = arith.constant 0 : i32
    %c0_i32_1 = arith.constant 0 : i32
    return %c0_i32, %c0_i32_0 : i32, i32
  }
  func.func @transform_5(%arg0: i32) -> (i32, i32) {
    %c0_i32 = arith.constant 0 : i32
    %c0_i32_0 = arith.constant 0 : i32
    return %arg0, %c0_i32 : i32, i32
  }
}

</mosaic_0001>

<llo_original>
// kernel: tpu_custom_call.1
$region0: #{tpu_custom_call.1}
  #allocation0 [shape = 'u32[]', space=smem, size = 0x4, offset = 0x4, fixed_abs, tag = 'smem constant byte address 0x4 - core index']
  #allocation1 [shape = 'u32[72,128]{1,0:T(1,128)}', space=vmem, size = 0x9000, scoped, tag = 'internal scratch']
  %s0 = inlined_call_operand.vmem [shape: f32[128,32], index: 0, kind: input, shape index: {}]
  %s1 = inlined_call_operand.vmem [shape: bf16[32,128], index: 1, kind: input, shape index: {}]
  %s2 = inlined_call_operand.vmem [shape: f32[1,128], index: 2, kind: input, shape index: {}]
  %s3 = inlined_call_operand.vmem [shape: bf16[128,32], index: 3, kind: input, shape index: {}]
  %s4 = inlined_call_operand.vmem [shape: f32[1,32], index: 4, kind: input, shape index: {}]
  %s5 = inlined_call_operand.vmem [shape: bf16[128,32], index: 5, kind: output, shape index: {}]
  %s6 = sld [smem:[#allocation0]]
  $region30: #{tpu_custom_call.1} parent=0
    _
  %s8 = ssub.s32 1, %s6
  %s9 = scalar_select 0, %s8, %s6
  // Predicated region
  $region2: #{tpu_custom_call.1} parent=0 // pred_check
    _
  $region3: #{tpu_custom_call.1} parent=0 // pred_check_branch
    %11 = sbr.rel (0) target = $region5
  $region4: #{tpu_custom_call.1} parent=0 // pred_region
    _
  $region5: #{tpu_custom_call.1} parent=0 // pred_fallthru
    _
  // Predicated region
  $region6: #{tpu_custom_call.1} parent=0 // pred_check
    _
  $region7: #{tpu_custom_call.1} parent=0 // pred_check_branch
    %13 = sbr.rel (0) target = $region9
  $region8: #{tpu_custom_call.1} parent=0 // pred_region
    _
  $region9: #{tpu_custom_call.1} parent=0 // pred_fallthru
    _
  // Predicated region
  $region10: #{tpu_custom_call.1} parent=0 // pred_check
    _
  $region11: #{tpu_custom_call.1} parent=0 // pred_check_branch
    %15 = sbr.rel (0) target = $region13
  $region12: #{tpu_custom_call.1} parent=0 // pred_region
    _
  $region13: #{tpu_custom_call.1} parent=0 // pred_fallthru
    _
  // Predicated region
  $region14: #{tpu_custom_call.1} parent=0 // pred_check
    _
  $region15: #{tpu_custom_call.1} parent=0 // pred_check_branch
    %17 = sbr.rel (0) target = $region17
  $region16: #{tpu_custom_call.1} parent=0 // pred_region
    _
  $region17: #{tpu_custom_call.1} parent=0 // pred_fallthru
    _
  // Predicated region
  $region18: #{tpu_custom_call.1} parent=0 // pred_check
    _
  $region19: #{tpu_custom_call.1} parent=0 // pred_check_branch
    %19 = sbr.rel (0) target = $region21
  $region20: #{tpu_custom_call.1} parent=0 // pred_region
    _
  $region21: #{tpu_custom_call.1} parent=0 // pred_fallthru
    _
  %v21 = vld [vmem:[%s0] sm:$0xff]
  %v22 = vld [vmem:[%s0 + $0x8] sm:$0xff]
  %v23 = vld [vmem:[%s0 + $0x10] sm:$0xff]
  %v24 = vld [vmem:[%s0 + $0x18] sm:$0xff]
  %v25 = vld [vmem:[%s0 + $0x20] sm:$0xff]
  %v26 = vld [vmem:[%s0 + $0x28] sm:$0xff]
  %v27 = vld [vmem:[%s0 + $0x30] sm:$0xff]
  %v28 = vld [vmem:[%s0 + $0x38] sm:$0xff]
  %v29 = vld [vmem:[%s0 + $0x40] sm:$0xff]
  %v30 = vld [vmem:[%s0 + $0x48] sm:$0xff]
  %v31 = vld [vmem:[%s0 + $0x50] sm:$0xff]
  %v32 = vld [vmem:[%s0 + $0x58] sm:$0xff]
  %v33 = vld [vmem:[%s0 + $0x60] sm:$0xff]
  %v34 = vld [vmem:[%s0 + $0x68] sm:$0xff]
  %v35 = vld [vmem:[%s0 + $0x70] sm:$0xff]
  %v36 = vld [vmem:[%s0 + $0x78] sm:$0xff]
  %v37 = vpack.c.bf16 %v22, %v21
  %v38 = vpack.c.bf16 %v24, %v23
  %v39 = vpack.c.bf16 %v26, %v25
  %v40 = vpack.c.bf16 %v28, %v27
  %v41 = vpack.c.bf16 %v30, %v29
  %v42 = vpack.c.bf16 %v32, %v31
  %v43 = vpack.c.bf16 %v34, %v33
  %v44 = vpack.c.bf16 %v36, %v35
  %v45 = vld [vmem:[%s1] sm:$0xf]
  %v46 = vld [vmem:[%s1 + $0x4] sm:$0xf]
  %v47 = vld [vmem:[%s1 + $0x8] sm:$0xf]
  %v48 = vld [vmem:[%s1 + $0xc] sm:$0xf]
  %v49 = vld [vmem:[%s2] sm:$0x1]
  %v51 = vperm.slane %v49, 0
  %v57 = vunpack.c.l.b16 %v45
  %v58 = vunpack.c.l.b16 %v46
  %v59 = vunpack.c.l.b16 %v47
  %v60 = vunpack.c.l.b16 %v48
  %v61 = vpack.c.b16 %v58, %v57
  %v62 = vpack.c.b16 %v60, %v59
  %vm65 = vcmask 261120
  %v67 = vsel %vm65, %v37, 0
  %v70 = vsel %vm65, %v38, 0
  %v73 = vsel %vm65, %v39, 0
  %v76 = vsel %vm65, %v40, 0
  %v79 = vsel %vm65, %v41, 0
  %v82 = vsel %vm65, %v42, 0
  %v85 = vsel %vm65, %v43, 0
  %v88 = vsel %vm65, %v44, 0
  %90 = vmatpush.bf16.msra.mxu0 0
  %91 = vmatpush.bf16.msra.mxu0 0
  %92 = vmatpush.bf16.msra.mxu0 0
  %93 = vmatpush.bf16.msra.mxu0 0
  %94 = vmatpush.bf16.msra.mxu0 0
  %95 = vmatpush.bf16.msra.mxu0 0
  %96 = vmatpush.bf16.msra.mxu0 %v62
  %97 = vmatpush.bf16.msra.mxu0 %v61
  %98 = vmatmul.bf16.gmra.mxu0 %v67
  %v99 = vpop.f32.mrf.mxu0
  %v100 = vadd.f32 %v51, %v99
  %v101 = vpop.f32.mrf.mxu0
  %v102 = vadd.f32 %v51, %v101
  %103 = vmatmul.bf16.gmra.mxu0 %v70
  %v104 = vpop.f32.mrf.mxu0
  %v105 = vadd.f32 %v51, %v104
  %v106 = vpop.f32.mrf.mxu0
  %v107 = vadd.f32 %v51, %v106
  %108 = vmatmul.bf16.gmra.mxu0 %v73
  %v109 = vpop.f32.mrf.mxu0
  %v110 = vadd.f32 %v51, %v109
  %v111 = vpop.f32.mrf.mxu0
  %v112 = vadd.f32 %v51, %v111
  %113 = vmatmul.bf16.gmra.mxu0 %v76
  %v114 = vpop.f32.mrf.mxu0
  %v115 = vadd.f32 %v51, %v114
  %v116 = vpop.f32.mrf.mxu0
  %v117 = vadd.f32 %v51, %v116
  %118 = vmatmul.bf16.gmra.mxu0 %v79
  %v119 = vpop.f32.mrf.mxu0
  %v120 = vadd.f32 %v51, %v119
  %v121 = vpop.f32.mrf.mxu0
  %v122 = vadd.f32 %v51, %v121
  %123 = vmatmul.bf16.gmra.mxu0 %v82
  %v124 = vpop.f32.mrf.mxu0
  %v125 = vadd.f32 %v51, %v124
  %v126 = vpop.f32.mrf.mxu0
  %v127 = vadd.f32 %v51, %v126
  %128 = vmatmul.bf16.gmra.mxu0 %v85
  %v129 = vpop.f32.mrf.mxu0
  %v130 = vadd.f32 %v51, %v129
  %v131 = vpop.f32.mrf.mxu0
  %v132 = vadd.f32 %v51, %v131
  %133 = vmatmul.bf16.gmra.mxu0 %v88
  %v134 = vpop.f32.mrf.mxu0
  %v135 = vadd.f32 %v51, %v134
  %v136 = vpop.f32.mrf.mxu0
  %v137 = vadd.f32 %v51, %v136
  %138 = vdwg.mxu0
  %v139 = vmax.f32 %v100, 0.0
  %v140 = vmax.f32 %v102, 0.0
  %v141 = vmax.f32 %v105, 0.0
  %v142 = vmax.f32 %v107, 0.0
  %v143 = vmax.f32 %v110, 0.0
  %v144 = vmax.f32 %v112, 0.0
  %v145 = vmax.f32 %v115, 0.0
  %v146 = vmax.f32 %v117, 0.0
  %v147 = vmax.f32 %v120, 0.0
  %v148 = vmax.f32 %v122, 0.0
  %v149 = vmax.f32 %v125, 0.0
  %v150 = vmax.f32 %v127, 0.0
  %v151 = vmax.f32 %v130, 0.0
  %v152 = vmax.f32 %v132, 0.0
  %v153 = vmax.f32 %v135, 0.0
  %v154 = vmax.f32 %v137, 0.0
  %v155 = vpack.c.bf16 %v140, %v139
  %v156 = vpack.c.bf16 %v142, %v141
  %v157 = vpack.c.bf16 %v144, %v143
  %v158 = vpack.c.bf16 %v146, %v145
  %v159 = vpack.c.bf16 %v148, %v147
  %v160 = vpack.c.bf16 %v150, %v149
  %v161 = vpack.c.bf16 %v152, %v151
  %v162 = vpack.c.bf16 %v154, %v153
  %v163 = vld [vmem:[%s3] sm:$0xf]
  %v164 = vld [vmem:[%s3 + $0x4] sm:$0xf]
  %v165 = vld [vmem:[%s3 + $0x8] sm:$0xf]
  %v166 = vld [vmem:[%s3 + $0xc] sm:$0xf]
  %v167 = vld [vmem:[%s3 + $0x10] sm:$0xf]
  %v168 = vld [vmem:[%s3 + $0x14] sm:$0xf]
  %v169 = vld [vmem:[%s3 + $0x18] sm:$0xf]
  %v170 = vld [vmem:[%s3 + $0x1c] sm:$0xf]
  %v171 = vld [vmem:[%s3 + $0x20] sm:$0xf]
  %v172 = vld [vmem:[%s3 + $0x24] sm:$0xf]
  %v173 = vld [vmem:[%s3 + $0x28] sm:$0xf]
  %v174 = vld [vmem:[%s3 + $0x2c] sm:$0xf]
  %v175 = vld [vmem:[%s3 + $0x30] sm:$0xf]
  %v176 = vld [vmem:[%s3 + $0x34] sm:$0xf]
  %v177 = vld [vmem:[%s3 + $0x38] sm:$0xf]
  %v178 = vld [vmem:[%s3 + $0x3c] sm:$0xf]
  %v179 = vld [vmem:[%s4] sm:$0x1]
  %v181 = vperm.slane %v179, 0
  %v199 = vunpack.c.l.b16 %v163
  %v200 = vunpack.c.l.b16 %v164
  %v201 = vunpack.c.l.b16 %v165
  %v202 = vunpack.c.l.b16 %v166
  %v203 = vunpack.c.l.b16 %v167
  %v204 = vunpack.c.l.b16 %v168
  %v205 = vunpack.c.l.b16 %v169
  %v206 = vunpack.c.l.b16 %v170
  %v207 = vunpack.c.l.b16 %v171
  %v208 = vunpack.c.l.b16 %v172
  %v209 = vunpack.c.l.b16 %v173
  %v210 = vunpack.c.l.b16 %v174
  %v211 = vunpack.c.l.b16 %v175
  %v212 = vunpack.c.l.b16 %v176
  %v213 = vunpack.c.l.b16 %v177
  %v214 = vunpack.c.l.b16 %v178
  %v215 = vpack.c.b16 %v200, %v199
  %v216 = vpack.c.b16 %v202, %v201
  %v217 = vpack.c.b16 %v204, %v203
  %v218 = vpack.c.b16 %v206, %v205
  %v219 = vpack.c.b16 %v208, %v207
  %v220 = vpack.c.b16 %v210, %v209
  %v221 = vpack.c.b16 %v212, %v211
  %v222 = vpack.c.b16 %v214, %v213
  %231 = vmatpush.bf16.msra.mxu0 %v222
  %232 = vmatpush.bf16.msra.mxu0 %v221
  %233 = vmatpush.bf16.msra.mxu0 %v220
  %234 = vmatpush.bf16.msra.mxu0 %v219
  %235 = vmatpush.bf16.msra.mxu0 %v218
  %236 = vmatpush.bf16.msra.mxu0 %v217
  %237 = vmatpush.bf16.msra.mxu0 %v216
  %238 = vmatpush.bf16.msra.mxu0 %v215
  %239 = vmatmul.bf16.gmra.mxu0 %v155
  %v240 = vpop.f32.mrf.mxu0
  %v241 = vadd.f32 %v181, %v240
  %v242 = vpop.f32.mrf.mxu0
  %v243 = vadd.f32 %v181, %v242
  %244 = vmatmul.bf16.gmra.mxu0 %v156
  %v245 = vpop.f32.mrf.mxu0
  %v246 = vadd.f32 %v181, %v245
  %v247 = vpop.f32.mrf.mxu0
  %v248 = vadd.f32 %v181, %v247
  %249 = vmatmul.bf16.gmra.mxu0 %v157
  %v250 = vpop.f32.mrf.mxu0
  %v251 = vadd.f32 %v181, %v250
  %v252 = vpop.f32.mrf.mxu0
  %v253 = vadd.f32 %v181, %v252
  %254 = vmatmul.bf16.gmra.mxu0 %v158
  %v255 = vpop.f32.mrf.mxu0
  %v256 = vadd.f32 %v181, %v255
  %v257 = vpop.f32.mrf.mxu0
  %v258 = vadd.f32 %v181, %v257
  %259 = vmatmul.bf16.gmra.mxu0 %v159
  %v260 = vpop.f32.mrf.mxu0
  %v261 = vadd.f32 %v181, %v260
  %v262 = vpop.f32.mrf.mxu0
  %v263 = vadd.f32 %v181, %v262
  %264 = vmatmul.bf16.gmra.mxu0 %v160
  %v265 = vpop.f32.mrf.mxu0
  %v266 = vadd.f32 %v181, %v265
  %v267 = vpop.f32.mrf.mxu0
  %v268 = vadd.f32 %v181, %v267
  %269 = vmatmul.bf16.gmra.mxu0 %v161
  %v270 = vpop.f32.mrf.mxu0
  %v271 = vadd.f32 %v181, %v270
  %v272 = vpop.f32.mrf.mxu0
  %v273 = vadd.f32 %v181, %v272
  %274 = vmatmul.bf16.gmra.mxu0 %v162
  %v275 = vpop.f32.mrf.mxu0
  %v276 = vadd.f32 %v181, %v275
  %v277 = vpop.f32.mrf.mxu0
  %v278 = vadd.f32 %v181, %v277
  %279 = vdwg.mxu0
  %v280 = vpack.c.bf16 %v241, %v241
  %v281 = vpack.c.bf16 %v243, %v243
  %v282 = vpack.c.bf16 %v246, %v246
  %v283 = vpack.c.bf16 %v248, %v248
  %v284 = vpack.c.bf16 %v251, %v251
  %v285 = vpack.c.bf16 %v253, %v253
  %v286 = vpack.c.bf16 %v256, %v256
  %v287 = vpack.c.bf16 %v258, %v258
  %v288 = vpack.c.bf16 %v261, %v261
  %v289 = vpack.c.bf16 %v263, %v263
  %v290 = vpack.c.bf16 %v266, %v266
  %v291 = vpack.c.bf16 %v268, %v268
  %v292 = vpack.c.bf16 %v271, %v271
  %v293 = vpack.c.bf16 %v273, %v273
  %v294 = vpack.c.bf16 %v276, %v276
  %v295 = vpack.c.bf16 %v278, %v278
  %vm296 = vcmask 257024
  %297 = vst.msk [vmem:[%s5] sm:$0xf] %vm296, %v280
  %298 = vst.msk [vmem:[%s5 + $0x4] sm:$0xf] %vm296, %v281
  %299 = vst.msk [vmem:[%s5 + $0x8] sm:$0xf] %vm296, %v282
  %300 = vst.msk [vmem:[%s5 + $0xc] sm:$0xf] %vm296, %v283
  %301 = vst.msk [vmem:[%s5 + $0x10] sm:$0xf] %vm296, %v284
  %302 = vst.msk [vmem:[%s5 + $0x14] sm:$0xf] %vm296, %v285
  %303 = vst.msk [vmem:[%s5 + $0x18] sm:$0xf] %vm296, %v286
  %304 = vst.msk [vmem:[%s5 + $0x1c] sm:$0xf] %vm296, %v287
  %305 = vst.msk [vmem:[%s5 + $0x20] sm:$0xf] %vm296, %v288
  %306 = vst.msk [vmem:[%s5 + $0x24] sm:$0xf] %vm296, %v289
  %307 = vst.msk [vmem:[%s5 + $0x28] sm:$0xf] %vm296, %v290
  %308 = vst.msk [vmem:[%s5 + $0x2c] sm:$0xf] %vm296, %v291
  %309 = vst.msk [vmem:[%s5 + $0x30] sm:$0xf] %vm296, %v292
  %310 = vst.msk [vmem:[%s5 + $0x34] sm:$0xf] %vm296, %v293
  %311 = vst.msk [vmem:[%s5 + $0x38] sm:$0xf] %vm296, %v294
  %312 = vst.msk [vmem:[%s5 + $0x3c] sm:$0xf] %vm296, %v295
  // Predicated region
  $region22: #{tpu_custom_call.1} parent=0 // pred_check
    _
  $region23: #{tpu_custom_call.1} parent=0 // pred_check_branch
    %314 = sbr.rel (0) target = $region25
  $region24: #{tpu_custom_call.1} parent=0 // pred_region
    _
  $region25: #{tpu_custom_call.1} parent=0 // pred_fallthru
    _
  // Predicated region
  $region26: #{tpu_custom_call.1} parent=0 // pred_check
    _
  $region27: #{tpu_custom_call.1} parent=0 // pred_check_branch
    %316 = sbr.rel (0) target = $region29
  $region28: #{tpu_custom_call.1} parent=0 // pred_region
    _
  $region29: #{tpu_custom_call.1} parent=0 // pred_fallthru
    _

// kernel: tpu_custom_call.1
$region0: #{tpu_custom_call.1}
  #allocation0 [shape = 'u32[]', space=smem, size = 0x4, offset = 0x4, fixed_abs, tag = 'smem constant byte address 0x4 - core index']
  #allocation1 [shape = 'u32[72,128]{1,0:T(1,128)}', space=vmem, size = 0x9000, scoped, tag = 'internal scratch']
  %s0 = inlined_call_operand.vmem [shape: f32[128,32], index: 0, kind: input, shape index: {}]
  %s1 = inlined_call_operand.vmem [shape: bf16[32,128], index: 1, kind: input, shape index: {}]
  %s2 = inlined_call_operand.vmem [shape: f32[1,128], index: 2, kind: input, shape index: {}]
  %s3 = inlined_call_operand.vmem [shape: bf16[128,32], index: 3, kind: input, shape index: {}]
  %s4 = inlined_call_operand.vmem [shape: f32[1,32], index: 4, kind: input, shape index: {}]
  %s5 = inlined_call_operand.vmem [shape: bf16[128,32], index: 5, kind: output, shape index: {}]
  %s6 = sld [smem:[#allocation0]]
  $region30: #{tpu_custom_call.1} parent=0
    _
  %s8 = ssub.s32 1, %s6
  %s9 = scalar_select 0, %s8, %s6
  // Predicated region
  $region2: #{tpu_custom_call.1} parent=0 // pred_check
    _
  $region3: #{tpu_custom_call.1} parent=0 // pred_check_branch
    %11 = sbr.rel (0) target = $region5
  $region4: #{tpu_custom_call.1} parent=0 // pred_region
    _
  $region5: #{tpu_custom_call.1} parent=0 // pred_fallthru
    _
  // Predicated region
  $region6: #{tpu_custom_call.1} parent=0 // pred_check
    _
  $region7: #{tpu_custom_call.1} parent=0 // pred_check_branch
    %13 = sbr.rel (0) target = $region9
  $region8: #{tpu_custom_call.1} parent=0 // pred_region
    _
  $region9: #{tpu_custom_call.1} parent=0 // pred_fallthru
    _
  // Predicated region
  $region10: #{tpu_custom_call.1} parent=0 // pred_check
    _
  $region11: #{tpu_custom_call.1} parent=0 // pred_check_branch
    %15 = sbr.rel (0) target = $region13
  $region12: #{tpu_custom_call.1} parent=0 // pred_region
    _
  $region13: #{tpu_custom_call.1} parent=0 // pred_fallthru
    _
  // Predicated region
  $region14: #{tpu_custom_call.1} parent=0 // pred_check
    _
  $region15: #{tpu_custom_call.1} parent=0 // pred_check_branch
    %17 = sbr.rel (0) target = $region17
  $region16: #{tpu_custom_call.1} parent=0 // pred_region
    _
  $region17: #{tpu_custom_call.1} parent=0 // pred_fallthru
    _
  // Predicated region
  $region18: #{tpu_custom_call.1} parent=0 // pred_check
    _
  $region19: #{tpu_custom_call.1} parent=0 // pred_check_branch
    %19 = sbr.rel (0) target = $region21
  $region20: #{tpu_custom_call.1} parent=0 // pred_region
    _
  $region21: #{tpu_custom_call.1} parent=0 // pred_fallthru
    _
  %v21 = vld [vmem:[%s0] sm:$0xff]
  %v22 = vld [vmem:[%s0 + $0x8] sm:$0xff]
  %v23 = vld [vmem:[%s0 + $0x10] sm:$0xff]
  %v24 = vld [vmem:[%s0 + $0x18] sm:$0xff]
  %v25 = vld [vmem:[%s0 + $0x20] sm:$0xff]
  %v26 = vld [vmem:[%s0 + $0x28] sm:$0xff]
  %v27 = vld [vmem:[%s0 + $0x30] sm:$0xff]
  %v28 = vld [vmem:[%s0 + $0x38] sm:$0xff]
  %v29 = vld [vmem:[%s0 + $0x40] sm:$0xff]
  %v30 = vld [vmem:[%s0 + $0x48] sm:$0xff]
  %v31 = vld [vmem:[%s0 + $0x50] sm:$0xff]
  %v32 = vld [vmem:[%s0 + $0x58] sm:$0xff]
  %v33 = vld [vmem:[%s0 + $0x60] sm:$0xff]
  %v34 = vld [vmem:[%s0 + $0x68] sm:$0xff]
  %v35 = vld [vmem:[%s0 + $0x70] sm:$0xff]
  %v36 = vld [vmem:[%s0 + $0x78] sm:$0xff]
  %v37 = vpack.c.bf16 %v22, %v21
  %v38 = vpack.c.bf16 %v24, %v23
  %v39 = vpack.c.bf16 %v26, %v25
  %v40 = vpack.c.bf16 %v28, %v27
  %v41 = vpack.c.bf16 %v30, %v29
  %v42 = vpack.c.bf16 %v32, %v31
  %v43 = vpack.c.bf16 %v34, %v33
  %v44 = vpack.c.bf16 %v36, %v35
  %v45 = vld [vmem:[%s1] sm:$0xf]
  %v46 = vld [vmem:[%s1 + $0x4] sm:$0xf]
  %v47 = vld [vmem:[%s1 + $0x8] sm:$0xf]
  %v48 = vld [vmem:[%s1 + $0xc] sm:$0xf]
  %v49 = vld [vmem:[%s2] sm:$0x1]
  %v51 = vperm.slane %v49, 0
  %v57 = vunpack.c.l.b16 %v45
  %v58 = vunpack.c.l.b16 %v46
  %v59 = vunpack.c.l.b16 %v47
  %v60 = vunpack.c.l.b16 %v48
  %v61 = vpack.c.b16 %v58, %v57
  %v62 = vpack.c.b16 %v60, %v59
  %vm65 = vcmask 261120
  %v67 = vsel %vm65, %v37, 0
  %v70 = vsel %vm65, %v38, 0
  %v73 = vsel %vm65, %v39, 0
  %v76 = vsel %vm65, %v40, 0
  %v79 = vsel %vm65, %v41, 0
  %v82 = vsel %vm65, %v42, 0
  %v85 = vsel %vm65, %v43, 0
  %v88 = vsel %vm65, %v44, 0
  %90 = vmatpush.bf16.msra.mxu0 0
  %91 = vmatpush.bf16.msra.mxu0 0
  %92 = vmatpush.bf16.msra.mxu0 0
  %93 = vmatpush.bf16.msra.mxu0 0
  %94 = vmatpush.bf16.msra.mxu0 0
  %95 = vmatpush.bf16.msra.mxu0 0
  %96 = vmatpush.bf16.msra.mxu0 %v62
  %97 = vmatpush.bf16.msra.mxu0 %v61
  %98 = vmatmul.bf16.gmra.mxu0 %v67
  %v99 = vpop.f32.mrf.mxu0
  %v100 = vadd.f32 %v51, %v99
  %v101 = vpop.f32.mrf.mxu0
  %v102 = vadd.f32 %v51, %v101
  %103 = vmatmul.bf16.gmra.mxu0 %v70
  %v104 = vpop.f32.mrf.mxu0
  %v105 = vadd.f32 %v51, %v104
  %v106 = vpop.f32.mrf.mxu0
  %v107 = vadd.f32 %v51, %v106
  %108 = vmatmul.bf16.gmra.mxu0 %v73
  %v109 = vpop.f32.mrf.mxu0
  %v110 = vadd.f32 %v51, %v109
  %v111 = vpop.f32.mrf.mxu0
  %v112 = vadd.f32 %v51, %v111
  %113 = vmatmul.bf16.gmra.mxu0 %v76
  %v114 = vpop.f32.mrf.mxu0
  %v115 = vadd.f32 %v51, %v114
  %v116 = vpop.f32.mrf.mxu0
  %v117 = vadd.f32 %v51, %v116
  %118 = vmatmul.bf16.gmra.mxu0 %v79
  %v119 = vpop.f32.mrf.mxu0
  %v120 = vadd.f32 %v51, %v119
  %v121 = vpop.f32.mrf.mxu0
  %v122 = vadd.f32 %v51, %v121
  %123 = vmatmul.bf16.gmra.mxu0 %v82
  %v124 = vpop.f32.mrf.mxu0
  %v125 = vadd.f32 %v51, %v124
  %v126 = vpop.f32.mrf.mxu0
  %v127 = vadd.f32 %v51, %v126
  %128 = vmatmul.bf16.gmra.mxu0 %v85
  %v129 = vpop.f32.mrf.mxu0
  %v130 = vadd.f32 %v51, %v129
  %v131 = vpop.f32.mrf.mxu0
  %v132 = vadd.f32 %v51, %v131
  %133 = vmatmul.bf16.gmra.mxu0 %v88
  %v134 = vpop.f32.mrf.mxu0
  %v135 = vadd.f32 %v51, %v134
  %v136 = vpop.f32.mrf.mxu0
  %v137 = vadd.f32 %v51, %v136
  %138 = vdwg.mxu0
  %v139 = vmax.f32 %v100, 0.0
  %v140 = vmax.f32 %v102, 0.0
  %v141 = vmax.f32 %v105, 0.0
  %v142 = vmax.f32 %v107, 0.0
  %v143 = vmax.f32 %v110, 0.0
  %v144 = vmax.f32 %v112, 0.0
  %v145 = vmax.f32 %v115, 0.0
  %v146 = vmax.f32 %v117, 0.0
  %v147 = vmax.f32 %v120, 0.0
  %v148 = vmax.f32 %v122, 0.0
  %v149 = vmax.f32 %v125, 0.0
  %v150 = vmax.f32 %v127, 0.0
  %v151 = vmax.f32 %v130, 0.0
  %v152 = vmax.f32 %v132, 0.0
  %v153 = vmax.f32 %v135, 0.0
  %v154 = vmax.f32 %v137, 0.0
  %v155 = vpack.c.bf16 %v140, %v139
  %v156 = vpack.c.bf16 %v142, %v141
  %v157 = vpack.c.bf16 %v144, %v143
  %v158 = vpack.c.bf16 %v146, %v145
  %v159 = vpack.c.bf16 %v148, %v147
  %v160 = vpack.c.bf16 %v150, %v149
  %v161 = vpack.c.bf16 %v152, %v151
  %v162 = vpack.c.bf16 %v154, %v153
  %v163 = vld [vmem:[%s3] sm:$0xf]
  %v164 = vld [vmem:[%s3 + $0x4] sm:$0xf]
  %v165 = vld [vmem:[%s3 + $0x8] sm:$0xf]
  %v166 = vld [vmem:[%s3 + $0xc] sm:$0xf]
  %v167 = vld [vmem:[%s3 + $0x10] sm:$0xf]
  %v168 = vld [vmem:[%s3 + $0x14] sm:$0xf]
  %v169 = vld [vmem:[%s3 + $0x18] sm:$0xf]
  %v170 = vld [vmem:[%s3 + $0x1c] sm:$0xf]
  %v171 = vld [vmem:[%s3 + $0x20] sm:$0xf]
  %v172 = vld [vmem:[%s3 + $0x24] sm:$0xf]
  %v173 = vld [vmem:[%s3 + $0x28] sm:$0xf]
  %v174 = vld [vmem:[%s3 + $0x2c] sm:$0xf]
  %v175 = vld [vmem:[%s3 + $0x30] sm:$0xf]
  %v176 = vld [vmem:[%s3 + $0x34] sm:$0xf]
  %v177 = vld [vmem:[%s3 + $0x38] sm:$0xf]
  %v178 = vld [vmem:[%s3 + $0x3c] sm:$0xf]
  %v179 = vld [vmem:[%s4] sm:$0x1]
  %v181 = vperm.slane %v179, 0
  %v199 = vunpack.c.l.b16 %v163
  %v200 = vunpack.c.l.b16 %v164
  %v201 = vunpack.c.l.b16 %v165
  %v202 = vunpack.c.l.b16 %v166
  %v203 = vunpack.c.l.b16 %v167
  %v204 = vunpack.c.l.b16 %v168
  %v205 = vunpack.c.l.b16 %v169
  %v206 = vunpack.c.l.b16 %v170
  %v207 = vunpack.c.l.b16 %v171
  %v208 = vunpack.c.l.b16 %v172
  %v209 = vunpack.c.l.b16 %v173
  %v210 = vunpack.c.l.b16 %v174
  %v211 = vunpack.c.l.b16 %v175
  %v212 = vunpack.c.l.b16 %v176
  %v213 = vunpack.c.l.b16 %v177
  %v214 = vunpack.c.l.b16 %v178
  %v215 = vpack.c.b16 %v200, %v199
  %v216 = vpack.c.b16 %v202, %v201
  %v217 = vpack.c.b16 %v204, %v203
  %v218 = vpack.c.b16 %v206, %v205
  %v219 = vpack.c.b16 %v208, %v207
  %v220 = vpack.c.b16 %v210, %v209
  %v221 = vpack.c.b16 %v212, %v211
  %v222 = vpack.c.b16 %v214, %v213
  %231 = vmatpush.bf16.msra.mxu0 %v222
  %232 = vmatpush.bf16.msra.mxu0 %v221
  %233 = vmatpush.bf16.msra.mxu0 %v220
  %234 = vmatpush.bf16.msra.mxu0 %v219
  %235 = vmatpush.bf16.msra.mxu0 %v218
  %236 = vmatpush.bf16.msra.mxu0 %v217
  %237 = vmatpush.bf16.msra.mxu0 %v216
  %238 = vmatpush.bf16.msra.mxu0 %v215
  %239 = vmatmul.bf16.gmra.mxu0 %v155
  %v240 = vpop.f32.mrf.mxu0
  %v241 = vadd.f32 %v181, %v240
  %v242 = vpop.f32.mrf.mxu0
  %v243 = vadd.f32 %v181, %v242
  %244 = vmatmul.bf16.gmra.mxu0 %v156
  %v245 = vpop.f32.mrf.mxu0
  %v246 = vadd.f32 %v181, %v245
  %v247 = vpop.f32.mrf.mxu0
  %v248 = vadd.f32 %v181, %v247
  %249 = vmatmul.bf16.gmra.mxu0 %v157
  %v250 = vpop.f32.mrf.mxu0
  %v251 = vadd.f32 %v181, %v250
  %v252 = vpop.f32.mrf.mxu0
  %v253 = vadd.f32 %v181, %v252
  %254 = vmatmul.bf16.gmra.mxu0 %v158
  %v255 = vpop.f32.mrf.mxu0
  %v256 = vadd.f32 %v181, %v255
  %v257 = vpop.f32.mrf.mxu0
  %v258 = vadd.f32 %v181, %v257
  %259 = vmatmul.bf16.gmra.mxu0 %v159
  %v260 = vpop.f32.mrf.mxu0
  %v261 = vadd.f32 %v181, %v260
  %v262 = vpop.f32.mrf.mxu0
  %v263 = vadd.f32 %v181, %v262
  %264 = vmatmul.bf16.gmra.mxu0 %v160
  %v265 = vpop.f32.mrf.mxu0
  %v266 = vadd.f32 %v181, %v265
  %v267 = vpop.f32.mrf.mxu0
  %v268 = vadd.f32 %v181, %v267
  %269 = vmatmul.bf16.gmra.mxu0 %v161
  %v270 = vpop.f32.mrf.mxu0
  %v271 = vadd.f32 %v181, %v270
  %v272 = vpop.f32.mrf.mxu0
  %v273 = vadd.f32 %v181, %v272
  %274 = vmatmul.bf16.gmra.mxu0 %v162
  %v275 = vpop.f32.mrf.mxu0
  %v276 = vadd.f32 %v181, %v275
  %v277 = vpop.f32.mrf.mxu0
  %v278 = vadd.f32 %v181, %v277
  %279 = vdwg.mxu0
  %v280 = vpack.c.bf16 %v241, %v241
  %v281 = vpack.c.bf16 %v243, %v243
  %v282 = vpack.c.bf16 %v246, %v246
  %v283 = vpack.c.bf16 %v248, %v248
  %v284 = vpack.c.bf16 %v251, %v251
  %v285 = vpack.c.bf16 %v253, %v253
  %v286 = vpack.c.bf16 %v256, %v256
  %v287 = vpack.c.bf16 %v258, %v258
  %v288 = vpack.c.bf16 %v261, %v261
  %v289 = vpack.c.bf16 %v263, %v263
  %v290 = vpack.c.bf16 %v266, %v266
  %v291 = vpack.c.bf16 %v268, %v268
  %v292 = vpack.c.bf16 %v271, %v271
  %v293 = vpack.c.bf16 %v273, %v273
  %v294 = vpack.c.bf16 %v276, %v276
  %v295 = vpack.c.bf16 %v278, %v278
  %vm296 = vcmask 257024
  %297 = vst.msk [vmem:[%s5] sm:$0xf] %vm296, %v280
  %298 = vst.msk [vmem:[%s5 + $0x4] sm:$0xf] %vm296, %v281
  %299 = vst.msk [vmem:[%s5 + $0x8] sm:$0xf] %vm296, %v282
  %300 = vst.msk [vmem:[%s5 + $0xc] sm:$0xf] %vm296, %v283
  %301 = vst.msk [vmem:[%s5 + $0x10] sm:$0xf] %vm296, %v284
  %302 = vst.msk [vmem:[%s5 + $0x14] sm:$0xf] %vm296, %v285
  %303 = vst.msk [vmem:[%s5 + $0x18] sm:$0xf] %vm296, %v286
  %304 = vst.msk [vmem:[%s5 + $0x1c] sm:$0xf] %vm296, %v287
  %305 = vst.msk [vmem:[%s5 + $0x20] sm:$0xf] %vm296, %v288
  %306 = vst.msk [vmem:[%s5 + $0x24] sm:$0xf] %vm296, %v289
  %307 = vst.msk [vmem:[%s5 + $0x28] sm:$0xf] %vm296, %v290
  %308 = vst.msk [vmem:[%s5 + $0x2c] sm:$0xf] %vm296, %v291
  %309 = vst.msk [vmem:[%s5 + $0x30] sm:$0xf] %vm296, %v292
  %310 = vst.msk [vmem:[%s5 + $0x34] sm:$0xf] %vm296, %v293
  %311 = vst.msk [vmem:[%s5 + $0x38] sm:$0xf] %vm296, %v294
  %312 = vst.msk [vmem:[%s5 + $0x3c] sm:$0xf] %vm296, %v295
  // Predicated region
  $region22: #{tpu_custom_call.1} parent=0 // pred_check
    _
  $region23: #{tpu_custom_call.1} parent=0 // pred_check_branch
    %314 = sbr.rel (0) target = $region25
  $region24: #{tpu_custom_call.1} parent=0 // pred_region
    _
  $region25: #{tpu_custom_call.1} parent=0 // pred_fallthru
    _
  // Predicated region
  $region26: #{tpu_custom_call.1} parent=0 // pred_check
    _
  $region27: #{tpu_custom_call.1} parent=0 // pred_check_branch
    %316 = sbr.rel (0) target = $region29
  $region28: #{tpu_custom_call.1} parent=0 // pred_region
    _
  $region29: #{tpu_custom_call.1} parent=0 // pred_fallthru
    _

</llo_original>
